<compile_context>
chip_gen: v5e
topology: v5e:2x2
jax: 0.10.0
libtpu: 0.0.40
codegen_flags: <defaults>
</compile_context>

<pallas_src>
import functools

import jax
import jax.numpy as jnp
from jax.experimental import pallas as pl
from jax.experimental.pallas import tpu as pltpu

# Static conv config (matches the PyTorch module).
CIN, COUT, KH, KW = 3, 6, 3, 3
STRIDE, PAD = 1, 0
KTAPS = KH * KW * CIN  # 27


def _pick_batch_tile(n, cin, hw, itemsize, target_bytes=1 << 20, max_tile=512):
    """Largest divisor of n giving ~target_bytes input tiles, keeping >=2 steps."""
    target = max(1, min(max_tile, target_bytes // max(1, cin * hw * itemsize)))
    divisors = [d for d in range(1, n + 1) if n % d == 0]
    bt = max([d for d in divisors if d <= target] or [1])
    if n // bt < 2:  # keep both v7x TensorCores busy when possible
        smaller = [d for d in divisors if n // d >= 2]
        if smaller:
            bt = max(smaller)
    return bt


def _conv2d_kernel(x_ref, w_ref, b_ref, o_ref, *, hw, img_w, ohw):
    """One batch tile, spatial-on-lanes.

    x_ref: (B_tile, CIN, H*W)    images, NCHW-flat (H*W on the lane axis)
    w_ref: (COUT, 27)            weights, tap-major / channel-minor (resident)
    b_ref: (COUT, 1)             bias (resident)
    o_ref: (B_tile, COUT, OH*W)  rows already cropped; columns >= OW are garbage
                                 (wrapped taps) and are sliced off by the caller.
    """
    b_tile = x_ref.shape[0]
    w = w_ref[...]      # hoisted out of the image loop
    bias = b_ref[...]   # (COUT, 1), broadcast over lanes

    # Loop over images in the tile; unroll only when the tile is small so the
    # LLO scheduler sees it without blowing up code size.
    @pl.loop(0, b_tile, unroll=(b_tile <= 8))
    def _(b):
        x = x_ref[b]  # (CIN, H*W), lane-dense

        # im2col via lane rolls (XLU slot, essentially free): output position p
        # for tap (kh, kw) reads x[:, p + kh*W + kw], i.e. a roll by -(off).
        rows = []
        for kh in range(KH):
            for kw in range(KW):
                off = kh * img_w + kw
                rows.append(x if off == 0
                            else pltpu.roll(x, shift=hw - off, axis=1))
        # (27, H*W) register value -- no VMEM scratch round trip.
        patches = jnp.concatenate(rows, axis=0)

        # Single fused K=27 contraction on the MXU, f32 accumulation.
        acc = jnp.dot(w, patches, preferred_element_type=jnp.float32)  # (COUT, H*W)
        acc = acc + bias                                               # lane-dense add

        # In-kernel row crop: keep only lanes [0, OH*W).
        o_ref[b] = acc[:, :ohw].astype(o_ref.dtype)


def conv2d_pallas(x_nchw, w_oihw, b):
    """x_nchw: (N, 3, H, W); w_oihw: (6, 3, 3, 3); b: (6,) -> (N, 6, OH, OW)."""
    n, cin, h, w = x_nchw.shape
    assert cin == CIN
    oh = (h - KH) // STRIDE + 1
    ow = (w - KW) // STRIDE + 1
    hw = h * w
    ohw = oh * w  # row-cropped flat spatial extent written by the kernel

    # Metadata-only reshape: contiguous NCHW is already the lane-dense layout.
    x_flat = x_nchw.reshape(n, CIN, hw)
    # (COUT, KH, KW, CIN) flattened tap-major / channel-minor to match the
    # patch row ordering built in the kernel.
    w_flat = jnp.transpose(w_oihw, (0, 2, 3, 1)).reshape(COUT, KTAPS)
    b2d = b.reshape(COUT, 1)

    bt = _pick_batch_tile(n, CIN, hw, x_nchw.dtype.itemsize)
    grid = (n // bt,)

    kernel = functools.partial(_conv2d_kernel, hw=hw, img_w=w, ohw=ohw)

    itemsize = x_nchw.dtype.itemsize
    cost = pl.CostEstimate(
        flops=2 * n * COUT * KTAPS * hw,
        transcendentals=0,
        bytes_accessed=(x_flat.size + w_flat.size + b2d.size + n * COUT * ohw)
        * itemsize,
    )

    out_flat = pl.pallas_call(
        kernel,
        out_shape=jax.ShapeDtypeStruct((n, COUT, ohw), x_nchw.dtype),
        grid_spec=pltpu.PrefetchScalarGridSpec(
            num_scalar_prefetch=0,
            grid=grid,
            in_specs=[
                pl.BlockSpec((bt, CIN, hw), lambda i: (i, 0, 0)),
                pl.BlockSpec((COUT, KTAPS), lambda i: (0, 0)),  # resident weights
                pl.BlockSpec((COUT, 1), lambda i: (0, 0)),      # resident bias
            ],
            out_specs=pl.BlockSpec((bt, COUT, ohw), lambda i: (i, 0, 0)),
        ),
        compiler_params=pltpu.CompilerParams(
            dimension_semantics=("parallel",)),  # batch tiles shard over v7x's 2 TCs
        cost_estimate=cost,
    )(x_flat, w_flat, b2d)

    # Only the narrow column crop remains (rows were cropped in-kernel).  In a
    # fused pipeline the consumer should take the width-padded (N, COUT, OH, W)
    # layout directly and absorb this slice; it is materialized here only so the
    # standalone script returns the exact PyTorch output shape.
    return out_flat.reshape(n, COUT, oh, w)[:, :, :, :ow]


if __name__ == "__main__":
    key = jax.random.PRNGKey(0)
    kx, kwt, kb = jax.random.split(key, 3)

    # Deterministic parameter init (PyTorch-style uniform bound 1/sqrt(fan_in)).
    fan_in = CIN * KH * KW
    bound = 1.0 / (fan_in ** 0.5)
    weight = jax.random.uniform(kwt, (COUT, CIN, KH, KW), jnp.float32,
                                -bound, bound)
    bias = jax.random.uniform(kb, (COUT,), jnp.float32, -bound, bound)

    # Small NCHW input consistent with Conv2d(3 -> 6, k=3).
    x = jax.random.normal(kx, (2, CIN, 16, 16), jnp.float32)

    out = conv2d_pallas(x, weight, bias)
    out = jax.block_until_ready(out)
    assert out.shape == (2, COUT, 14, 14), out.shape

    # Reference check against XLA's conv (NCHW / OIHW).
    ref = jax.lax.conv_general_dilated(
        x, weight, window_strides=(1, 1), padding="VALID",
        dimension_numbers=("NCHW", "OIHW", "NCHW"),
    ) + bias.reshape(1, COUT, 1, 1)
    assert jnp.allclose(out, ref, atol=1e-4, rtol=1e-4)

    print("KERNEL_OK")
</pallas_src>

<mosaic_0001>
module attributes {stable_mosaic.version = 11 : i64} {
  func.func @_conv2d_kernel(%arg0: i32, %arg1: memref<1x3x256xf32, #tpu.memory_space<vmem>>, %arg2: memref<6x27xf32, #tpu.memory_space<vmem>>, %arg3: memref<6x1xf32, #tpu.memory_space<vmem>>, %arg4: memref<1x6x224xf32, #tpu.memory_space<vmem>>) attributes {dimension_semantics = [#tpu.dimension_semantics<parallel>], iteration_bounds = array<i64: 2>, scalar_prefetch = 0 : i64, scratch_operands = 0 : i64, tpu.core_type = #tpu.core_type<tc>, window_params = [{transform_indices = @transform_0, window_bounds = array<i64: 1, 3, 256>}, {pipeline_mode = #tpu.pipeline_mode<synchronous>, transform_indices = @transform_1, window_bounds = array<i64: 6, 27>}, {pipeline_mode = #tpu.pipeline_mode<synchronous>, transform_indices = @transform_2, window_bounds = array<i64: 6, 1>}, {transform_indices = @transform_3, window_bounds = array<i64: 1, 6, 224>}]} {
    %c0 = arith.constant 0 : index
    %c0_0 = arith.constant 0 : index
    %0 = vector.load %arg2[%c0, %c0_0] : memref<6x27xf32, #tpu.memory_space<vmem>>, vector<6x27xf32>
    %c0_1 = arith.constant 0 : index
    %c0_2 = arith.constant 0 : index
    %1 = vector.load %arg3[%c0_1, %c0_2] : memref<6x1xf32, #tpu.memory_space<vmem>>, vector<6x1xf32>
    %c0_i32 = arith.constant 0 : i32
    %c1_i32 = arith.constant 1 : i32
    %2 = arith.muli %c0_i32, %c1_i32 : i32
    %c0_i32_3 = arith.constant 0 : i32
    %3 = arith.addi %c0_i32_3, %2 : i32
    %4 = arith.index_cast %3 : i32 to index
    %c0_4 = arith.constant 0 : index
    %c0_5 = arith.constant 0 : index
    %5 = vector.load %arg1[%4, %c0_4, %c0_5] : memref<1x3x256xf32, #tpu.memory_space<vmem>>, vector<1x3x256xf32>
    %6 = vector.shape_cast %5 : vector<1x3x256xf32> to vector<3x256xf32>
    %c255_i32 = arith.constant 255 : i32
    %7 = tpu.dynamic_rotate %6 by %c255_i32 dim 1 : vector<3x256xf32>, i32 -> vector<3x256xf32>
    %c254_i32 = arith.constant 254 : i32
    %8 = tpu.dynamic_rotate %6 by %c254_i32 dim 1 : vector<3x256xf32>, i32 -> vector<3x256xf32>
    %c240_i32 = arith.constant 240 : i32
    %9 = tpu.dynamic_rotate %6 by %c240_i32 dim 1 : vector<3x256xf32>, i32 -> vector<3x256xf32>
    %c239_i32 = arith.constant 239 : i32
    %10 = tpu.dynamic_rotate %6 by %c239_i32 dim 1 : vector<3x256xf32>, i32 -> vector<3x256xf32>
    %c238_i32 = arith.constant 238 : i32
    %11 = tpu.dynamic_rotate %6 by %c238_i32 dim 1 : vector<3x256xf32>, i32 -> vector<3x256xf32>
    %c224_i32 = arith.constant 224 : i32
    %12 = tpu.dynamic_rotate %6 by %c224_i32 dim 1 : vector<3x256xf32>, i32 -> vector<3x256xf32>
    %c223_i32 = arith.constant 223 : i32
    %13 = tpu.dynamic_rotate %6 by %c223_i32 dim 1 : vector<3x256xf32>, i32 -> vector<3x256xf32>
    %c222_i32 = arith.constant 222 : i32
    %14 = tpu.dynamic_rotate %6 by %c222_i32 dim 1 : vector<3x256xf32>, i32 -> vector<3x256xf32>
    %15 = tpu.concatenate %6, %7, %8, %9, %10, %11, %12, %13, %14 in 0 : vector<3x256xf32>, vector<3x256xf32>, vector<3x256xf32>, vector<3x256xf32>, vector<3x256xf32>, vector<3x256xf32>, vector<3x256xf32>, vector<3x256xf32>, vector<3x256xf32> -> vector<27x256xf32>
    %cst = arith.constant dense<0.000000e+00> : vector<6x256xf32>
    %16 = tpu.matmul %0, %15, %cst {dimension_numbers = #tpu.dot_dimension_numbers<[1], [0], [0], [1], [0, 0, 1, 1], [], []>} : vector<6x27xf32>, vector<27x256xf32>, vector<6x256xf32> -> vector<6x256xf32>
    %17 = vector.broadcast %1 : vector<6x1xf32> to vector<6x256xf32>
    %18 = arith.addf %16, %17 : vector<6x256xf32>
    %19 = vector.extract_strided_slice %18 {offsets = [0, 0], sizes = [6, 224], strides = [1, 1]} : vector<6x256xf32> to vector<6x224xf32>
    %20 = arith.index_cast %3 : i32 to index
    %c0_6 = arith.constant 0 : index
    %c0_7 = arith.constant 0 : index
    %21 = vector.load %arg4[%20, %c0_6, %c0_7] : memref<1x6x224xf32, #tpu.memory_space<vmem>>, vector<1x6x224xf32>
    %22 = vector.shape_cast %21 : vector<1x6x224xf32> to vector<6x224xf32>
    %23 = vector.shape_cast %19 : vector<6x224xf32> to vector<1x6x224xf32>
    tpu.vector_store %arg4[%20, %c0_6, %c0_7], %23 {strides = array<i32>} : memref<1x6x224xf32, #tpu.memory_space<vmem>>, vector<1x6x224xf32>,
    %c1_i32_8 = arith.constant 1 : i32
    return
  }
  func.func @transform_0(%arg0: i32) -> (i32, i32, i32) {
    %c0_i32 = arith.constant 0 : i32
    %c0_i32_0 = arith.constant 0 : i32
    %c0_i32_1 = arith.constant 0 : i32
    return %arg0, %c0_i32, %c0_i32_0 : i32, i32, i32
  }
  func.func @transform_1(%arg0: i32) -> (i32, i32) {
    %c0_i32 = arith.constant 0 : i32
    %c0_i32_0 = arith.constant 0 : i32
    %c0_i32_1 = arith.constant 0 : i32
    return %c0_i32, %c0_i32_0 : i32, i32
  }
  func.func @transform_2(%arg0: i32) -> (i32, i32) {
    %c0_i32 = arith.constant 0 : i32
    %c0_i32_0 = arith.constant 0 : i32
    %c0_i32_1 = arith.constant 0 : i32
    return %c0_i32, %c0_i32_0 : i32, i32
  }
  func.func @transform_3(%arg0: i32) -> (i32, i32, i32) {
    %c0_i32 = arith.constant 0 : i32
    %c0_i32_0 = arith.constant 0 : i32
    %c0_i32_1 = arith.constant 0 : i32
    return %arg0, %c0_i32, %c0_i32_0 : i32, i32, i32
  }
}

</mosaic_0001>

<llo_original>
// kernel: tpu_custom_call.1
$region0: #{tpu_custom_call.1}
  #allocation0 [shape = 'u32[]', space=smem, size = 0x4, offset = 0x4, fixed_abs, tag = 'smem constant byte address 0x4 - core index']
  #allocation1 [shape = 'u32[72,128]{1,0:T(1,128)}', space=vmem, size = 0x9000, scoped, tag = 'internal scratch']
  %s0 = inlined_call_operand.vmem [shape: f32[2,3,256], index: 0, kind: input, shape index: {}]
  %s1 = inlined_call_operand.vmem [shape: f32[6,27], index: 1, kind: input, shape index: {}]
  %s2 = inlined_call_operand.vmem [shape: f32[6,1], index: 2, kind: input, shape index: {}]
  %s3 = inlined_call_operand.vmem [shape: f32[2,6,224], index: 3, kind: output, shape index: {}]
  %s4 = sld [smem:[#allocation0]]
  $region45: #{tpu_custom_call.1} parent=0
    _
  %s6 = ssub.s32 1, %s4
  %s7 = scalar_select 0, %s6, %s4
  loop: start=0, step=1, limit=4
  $region2: #{tpu_custom_call.1} parent=0 // loop_pre_header
    _
  $region3: #{tpu_custom_call.1} parent=0 // loop_header
    %s9 = sphi 0, %s13
    %p10 = scmp.ge.s32.totalorder %s9, 4
    %s19 = sphi 0, %s21
    %s22 = sphi 0, %s19
    %s23 = sphi 0, %s22
    %s39 = sphi 0, %s23
    %s43 = sphi 0, %s43
    %s45 = sphi 0, %s43
    %s46 = sphi 0, %s45
    %s60 = sphi 0, %s46
    %s64 = sphi 0, %s64
    %s66 = sphi 0, %s64
    %s67 = sphi 0, %s66
    %s81 = sphi 0, %s67
    %s87 = sphi 0, %s89
    %s90 = sphi 0, %s87
    %s91 = sphi 0, %s90
    %s107 = sphi 0, %s91
  $region4: #{tpu_custom_call.1} parent=0 // loop_header_branch
    %12 = sbr.rel (%p10) target = $region8
  $region5: #{tpu_custom_call.1} parent=0 // loop_body
    %s14 = ssub.s32 %s9, 1
    %s15 = ssub.s32 %s9, 2
    %s16 = sadd.s32 %s9, 1
    %s17 = ssub.s32 %s9, %s16
    %p18 = scmp.eq.s32.totalorder %s17, 0
    %s20 = sadd.s32 %s19, 1
    %s21 = scalar_select %p18, %s19, %s20
    %p24 = pneg %p18
    %p25 = scmp.eq.s32.totalorder %s9, 1
    %p26 = por %p24, %p25
    %p27 = scmp.ne.s32.totalorder %s19, %s22
    %p28 = scmp.eq.s32.totalorder %s9, 0
    %p29 = por %p27, %p28
    %p30 = scmp.ne.s32.totalorder %s19, %s22
    %p31 = scmp.eq.s32.totalorder %s14, 1
    %p32 = por %p30, %p31
    %p33 = scmp.ne.s32.totalorder %s22, %s23
    %p34 = scmp.eq.s32.totalorder %s14, 0
    %p35 = por %p33, %p34
    %p36 = scmp.ne.s32.totalorder %s22, %s23
    %p37 = scmp.eq.s32.totalorder %s15, 1
    %p38 = por %p36, %p37
    %p40 = scmp.ne.s32.totalorder %s23, %s39
    %p41 = scmp.eq.s32.totalorder %s15, 0
    %p42 = por %p40, %p41
    %s44 = sadd.s32 %s43, 1
    %p47 = scmp.eq.s32.totalorder %s9, 1
    %p48 = scmp.ne.s32.totalorder %s43, %s45
    %p49 = scmp.eq.s32.totalorder %s9, 0
    %p50 = por %p48, %p49
    %p51 = scmp.ne.s32.totalorder %s43, %s45
    %p52 = scmp.eq.s32.totalorder %s14, 1
    %p53 = por %p51, %p52
    %p54 = scmp.ne.s32.totalorder %s45, %s46
    %p55 = scmp.eq.s32.totalorder %s14, 0
    %p56 = por %p54, %p55
    %p57 = scmp.ne.s32.totalorder %s45, %s46
    %p58 = scmp.eq.s32.totalorder %s15, 1
    %p59 = por %p57, %p58
    %p61 = scmp.ne.s32.totalorder %s46, %s60
    %p62 = scmp.eq.s32.totalorder %s15, 0
    %p63 = por %p61, %p62
    %s65 = sadd.s32 %s64, 1
    %p68 = scmp.eq.s32.totalorder %s9, 1
    %p69 = scmp.ne.s32.totalorder %s64, %s66
    %p70 = scmp.eq.s32.totalorder %s9, 0
    %p71 = por %p69, %p70
    %p72 = scmp.ne.s32.totalorder %s64, %s66
    %p73 = scmp.eq.s32.totalorder %s14, 1
    %p74 = por %p72, %p73
    %p75 = scmp.ne.s32.totalorder %s66, %s67
    %p76 = scmp.eq.s32.totalorder %s14, 0
    %p77 = por %p75, %p76
    %p78 = scmp.ne.s32.totalorder %s66, %s67
    %p79 = scmp.eq.s32.totalorder %s15, 1
    %p80 = por %p78, %p79
    %p82 = scmp.ne.s32.totalorder %s67, %s81
    %p83 = scmp.eq.s32.totalorder %s15, 0
    %p84 = por %p82, %p83
    %s85 = ssub.s32 %s9, %s16
    %p86 = scmp.eq.s32.totalorder %s85, 0
    %s88 = sadd.s32 %s87, 1
    %s89 = scalar_select %p86, %s87, %s88
    %p92 = pneg %p86
    %p93 = scmp.eq.s32.totalorder %s9, 1
    %p94 = por %p92, %p93
    %p95 = scmp.ne.s32.totalorder %s87, %s90
    %p96 = scmp.eq.s32.totalorder %s9, 0
    %p97 = por %p95, %p96
    %p98 = scmp.ne.s32.totalorder %s87, %s90
    %p99 = scmp.eq.s32.totalorder %s14, 1
    %p100 = por %p98, %p99
    %p101 = scmp.ne.s32.totalorder %s90, %s91
    %p102 = scmp.eq.s32.totalorder %s14, 0
    %p103 = por %p101, %p102
    %p104 = scmp.ne.s32.totalorder %s90, %s91
    %p105 = scmp.eq.s32.totalorder %s15, 1
    %p106 = por %p104, %p105
    %p108 = scmp.ne.s32.totalorder %s91, %s107
    %p109 = scmp.eq.s32.totalorder %s15, 0
    %p110 = por %p108, %p109
    %p111 = scmp.le.s32.totalorder 1, %s9
    %p112 = scmp.lt.s32.totalorder %s9, 3
    %p113 = pnand %p111, %p112
    %p114 = pneg %p113
    // Predicated region
    $region9: #{tpu_custom_call.1} parent=5 // pred_check
      _
    $region10: #{tpu_custom_call.1} parent=5 // pred_check_branch
      %116 = sbr.rel (%p113) target = $region12
    $region11: #{tpu_custom_call.1} parent=5 // pred_region
      %s117 = ssub.s32 %s9, 1
      // Predicated region
      $region13: #{tpu_custom_call.1} parent=11 // pred_check
        %p118 = pneg %p56
      $region14: #{tpu_custom_call.1} parent=11 // pred_check_branch
        %120 = sbr.rel (%p118) target = $region16
      $region15: #{tpu_custom_call.1} parent=11 // pred_region
        _
      $region16: #{tpu_custom_call.1} parent=11 // pred_fallthru
        _
      // Predicated region
      $region17: #{tpu_custom_call.1} parent=11 // pred_check
        %p121 = pneg %p77
      $region18: #{tpu_custom_call.1} parent=11 // pred_check_branch
        %123 = sbr.rel (%p121) target = $region20
      $region19: #{tpu_custom_call.1} parent=11 // pred_region
        _
      $region20: #{tpu_custom_call.1} parent=11 // pred_fallthru
        _
    $region12: #{tpu_custom_call.1} parent=5 // pred_fallthru
      _
    %p124 = scmp.lt.s32.totalorder %s9, 2
    // Predicated region
    $region21: #{tpu_custom_call.1} parent=5 // pred_check
      %p125 = pneg %p124
    $region22: #{tpu_custom_call.1} parent=5 // pred_check_branch
      %127 = sbr.rel (%p125) target = $region24
    $region23: #{tpu_custom_call.1} parent=5 // pred_region
      // Predicated region
      $region25: #{tpu_custom_call.1} parent=23 // pred_check
        %p128 = pneg %p29
      $region26: #{tpu_custom_call.1} parent=23 // pred_check_branch
        %130 = sbr.rel (%p128) target = $region28
      $region27: #{tpu_custom_call.1} parent=23 // pred_region
        %p131 = scmp.lt.s32.totalorder %s9, 1
        %s132 = scalar_select %p131, %s9, 1
        %s133 = smul.addr %s132, 2
        %s134 = smul.addr %s133, 4
        %s135 = scalar_lea.vmem %s0, %s134
      $region28: #{tpu_custom_call.1} parent=23 // pred_fallthru
        _
    $region24: #{tpu_custom_call.1} parent=5 // pred_fallthru
      _
    %p136 = scmp.le.s32.totalorder 1, %s9
    %p137 = scmp.lt.s32.totalorder %s9, 3
    %p138 = pnand %p136, %p137
    %p139 = pneg %p138
    // Predicated region
    $region29: #{tpu_custom_call.1} parent=5 // pred_check
      _
    $region30: #{tpu_custom_call.1} parent=5 // pred_check_branch
      %141 = sbr.rel (%p138) target = $region32
    $region31: #{tpu_custom_call.1} parent=5 // pred_region
      %s142 = ssub.s32 %s9, 1
      %p143 = scmp.lt.s32.totalorder %s14, 1
      %s144 = scalar_select %p143, %s14, 1
      %s145 = smul.addr %s144, 2
      %s146 = smul.addr %s145, 4
      %s147 = scalar_lea.vmem %s0, %s146
      %p148 = pneg %p35
      %p149 = pneg %p32
      %p150 = pneg %p56
      %p151 = pneg %p53
      %p152 = pneg %p77
      %p153 = pneg %p74
      %p154 = pneg %p103
      %p155 = pneg %p100
      %p156 = scmp.lt.s32.totalorder %s14, 1
      %s157 = scalar_select %p156, %s14, 1
      %s158 = smul.addr %s157, 2
      %s159 = smul.addr %s158, 8
      %s160 = scalar_lea.vmem %s3, %s159
      %p161 = scmp.lt.s32.totalorder %s14, 1
      %s162 = scalar_select %p161, %s14, 1
      %s163 = smul.addr %s162, 2
      %s164 = smul.addr %s163, 4
      %s165 = scalar_lea.vmem %s0, %s164
      %p166 = scmp.lt.s32.totalorder %s14, 1
      %s167 = scalar_select %p166, %s14, 1
      %s168 = smul.addr %s167, 2
      %s169 = smul.addr %s168, 8
      %s170 = scalar_lea.vmem %s3, %s169
      %v171 = vld [vmem:[%s1] sm:$0x3f]
      %v172 = vld [vmem:[%s2] sm:$0x3f]
      %v173 = vld [vmem:[%s165] sm:$0x77]
      %175 = vst [vmem:[#allocation1] ss:$2 sm:$0xff] %v173
      %v176 = vld.sshfl [vmem:[#allocation1] sm:$0xff pattern:$0x75316420]
      %v177 = vld.sshfl [vmem:[#allocation1 + $0x8] sm:$0xff pattern:$0x75316420]
      %180 = vrot.lane.b32.xlu0 %v176, 127
      %v181 = vpop.permute.xlu0 %180
      %182 = vrot.lane.b32.xlu0 %v177, 127
      %v183 = vpop.permute.xlu0 %182
      %v184 = vlaneseq
      %v185 = vand.u32 %v184, 127
      %vm186 = vcmp.lt.s32.totalorder %v185, 127
      %v187 = vsel %vm186, %v181, %v183
      %v188 = vsel %vm186, %v183, %v181
      %189 = vst [vmem:[#allocation1] ss:$2 sm:$0xff] %v173
      %v190 = vld.sshfl [vmem:[#allocation1] sm:$0xff pattern:$0x75316420]
      %v191 = vld.sshfl [vmem:[#allocation1 + $0x8] sm:$0xff pattern:$0x75316420]
      %194 = vrot.lane.b32.xlu0 %v190, 126
      %v195 = vpop.permute.xlu0 %194
      %196 = vrot.lane.b32.xlu0 %v191, 126
      %v197 = vpop.permute.xlu0 %196
      %vm198 = vcmp.lt.s32.totalorder %v185, 126
      %v199 = vsel %vm198, %v195, %v197
      %v200 = vsel %vm198, %v197, %v195
      %201 = vst [vmem:[#allocation1] ss:$2 sm:$0xff] %v173
      %v202 = vld.sshfl [vmem:[#allocation1] sm:$0xff pattern:$0x75316420]
      %v203 = vld.sshfl [vmem:[#allocation1 + $0x8] sm:$0xff pattern:$0x75316420]
      %206 = vrot.lane.b32.xlu0 %v202, 112
      %v207 = vpop.permute.xlu0 %206
      %208 = vrot.lane.b32.xlu0 %v203, 112
      %v209 = vpop.permute.xlu0 %208
      %vm210 = vcmp.lt.s32.totalorder %v185, 112
      %v211 = vsel %vm210, %v207, %v209
      %v212 = vsel %vm210, %v209, %v207
      %213 = vst [vmem:[#allocation1] ss:$2 sm:$0xff] %v173
      %v214 = vld.sshfl [vmem:[#allocation1] sm:$0xff pattern:$0x75316420]
      %v215 = vld.sshfl [vmem:[#allocation1 + $0x8] sm:$0xff pattern:$0x75316420]
      %218 = vrot.lane.b32.xlu0 %v214, 111
      %v219 = vpop.permute.xlu0 %218
      %220 = vrot.lane.b32.xlu0 %v215, 111
      %v221 = vpop.permute.xlu0 %220
      %vm222 = vcmp.lt.s32.totalorder %v185, 111
      %v223 = vsel %vm222, %v219, %v221
      %v224 = vsel %vm222, %v221, %v219
      %225 = vst [vmem:[#allocation1] ss:$2 sm:$0xff] %v173
      %v226 = vld.sshfl [vmem:[#allocation1] sm:$0xff pattern:$0x75316420]
      %v227 = vld.sshfl [vmem:[#allocation1 + $0x8] sm:$0xff pattern:$0x75316420]
      %230 = vrot.lane.b32.xlu0 %v226, 110
      %v231 = vpop.permute.xlu0 %230
      %232 = vrot.lane.b32.xlu0 %v227, 110
      %v233 = vpop.permute.xlu0 %232
      %vm234 = vcmp.lt.s32.totalorder %v185, 110
      %v235 = vsel %vm234, %v231, %v233
      %v236 = vsel %vm234, %v233, %v231
      %237 = vst [vmem:[#allocation1] ss:$2 sm:$0xff] %v173
      %v238 = vld.sshfl [vmem:[#allocation1] sm:$0xff pattern:$0x75316420]
      %v239 = vld.sshfl [vmem:[#allocation1 + $0x8] sm:$0xff pattern:$0x75316420]
      %242 = vrot.lane.b32.xlu0 %v238, 96
      %v243 = vpop.permute.xlu0 %242
      %244 = vrot.lane.b32.xlu0 %v239, 96
      %v245 = vpop.permute.xlu0 %244
      %vm246 = vcmp.lt.s32.totalorder %v185, 96
      %v247 = vsel %vm246, %v243, %v245
      %v248 = vsel %vm246, %v245, %v243
      %249 = vst [vmem:[#allocation1] ss:$2 sm:$0xff] %v173
      %v250 = vld.sshfl [vmem:[#allocation1] sm:$0xff pattern:$0x75316420]
      %v251 = vld.sshfl [vmem:[#allocation1 + $0x8] sm:$0xff pattern:$0x75316420]
      %254 = vrot.lane.b32.xlu0 %v250, 95
      %v255 = vpop.permute.xlu0 %254
      %256 = vrot.lane.b32.xlu0 %v251, 95
      %v257 = vpop.permute.xlu0 %256
      %vm258 = vcmp.lt.s32.totalorder %v185, 95
      %v259 = vsel %vm258, %v255, %v257
      %v260 = vsel %vm258, %v257, %v255
      %261 = vst [vmem:[#allocation1] ss:$2 sm:$0xff] %v173
      %v262 = vld.sshfl [vmem:[#allocation1] sm:$0xff pattern:$0x75316420]
      %v263 = vld.sshfl [vmem:[#allocation1 + $0x8] sm:$0xff pattern:$0x75316420]
      %266 = vrot.lane.b32.xlu0 %v262, 94
      %v267 = vpop.permute.xlu0 %266
      %268 = vrot.lane.b32.xlu0 %v263, 94
      %v269 = vpop.permute.xlu0 %268
      %vm270 = vcmp.lt.s32.totalorder %v185, 94
      %v271 = vsel %vm270, %v267, %v269
      %v272 = vsel %vm270, %v269, %v267
      %273 = vst [vmem:[#allocation1] ss:$2 sm:$0xff] %v173
      %v274 = vld.sshfl [vmem:[#allocation1] sm:$0xff pattern:$0x75316420]
      %v275 = vld.sshfl [vmem:[#allocation1 + $0x8] sm:$0xff pattern:$0x75316420]
      %v280 = vrot.slane %v187, 5
      %v281 = vrot.slane %v188, 5
      %v286 = vrot.slane %v199, 2
      %v287 = vrot.slane %v200, 2
      %v292 = vrot.slane %v211, 7
      %v293 = vrot.slane %v212, 7
      %v298 = vrot.slane %v223, 4
      %v299 = vrot.slane %v224, 4
      %v304 = vrot.slane %v235, 1
      %v305 = vrot.slane %v236, 1
      %v310 = vrot.slane %v247, 6
      %v311 = vrot.slane %v248, 6
      %v316 = vrot.slane %v259, 3
      %v317 = vrot.slane %v260, 3
      %vm320 = vcmask 1042432
      %v321 = vsel %vm320, %v274, %v280
      %v322 = vsel %vm320, %v275, %v281
      %vm323 = vcmask 1045504
      %v324 = vsel %vm323, %v321, %v286
      %v325 = vsel %vm323, %v322, %v287
      %vm326 = vcmask 1040384
      %v327 = vsel %vm326, %v286, %v292
      %v328 = vsel %vm326, %v287, %v293
      %vm329 = vcmask 1043456
      %v330 = vsel %vm329, %v327, %v298
      %v331 = vsel %vm329, %v328, %v299
      %vm332 = vcmask 1046528
      %v333 = vsel %vm332, %v330, %v304
      %v334 = vsel %vm332, %v331, %v305
      %vm335 = vcmask 1041408
      %v336 = vsel %vm335, %v304, %v310
      %v337 = vsel %vm335, %v305, %v311
      %vm338 = vcmask 1044480
      %v339 = vsel %vm338, %v336, %v316
      %v340 = vsel %vm338, %v337, %v317
      %342 = vset.pattern.permute.xlu0 0
      %343 = vperm.xlu0 %342, %v172
      %v344 = vpop.permute.xlu0 %343
      %vm346 = vcmask 220160
      %v348 = vsel %vm346, %v171, 0
      %v351 = vsel %vm320, %v271, 0
      %v354 = vsel %vm320, %v272, 0
      %356 = vmatpush.msra.mxu0 0.0
      %357 = vmatpush.msra.mxu0 0.0
      %358 = vmatpush.msra.mxu0 0.0
      %359 = vmatpush.msra.mxu0 0.0
      %360 = vmatpush.msra.mxu0 0.0
      %361 = vmatpush.msra.mxu0 0.0
      %362 = vmatpush.msra.mxu0 0.0
      %363 = vmatpush.msra.mxu0 0.0
      %364 = vmatpush.msra.mxu0 0.0
      %365 = vmatpush.msra.mxu0 0.0
      %366 = vmatpush.msra.mxu0 0.0
      %367 = vmatpush.msra.mxu0 0.0
      %368 = vmatpush.msra.mxu0 %v351
      %369 = vmatpush.msra.mxu0 %v339
      %370 = vmatpush.msra.mxu0 %v333
      %371 = vmatpush.msra.mxu0 %v324
      %372 = vmatmul.f32.gmra.mxu0 %v348
      %v373 = vpop.f32.mrf.mxu0
      %v374 = vadd.f32 %v344, %v373
      %375 = vdwg.mxu0
      %376 = vmatpush.msra.mxu0 0.0
      %377 = vmatpush.msra.mxu0 0.0
      %378 = vmatpush.msra.mxu0 0.0
      %379 = vmatpush.msra.mxu0 0.0
      %380 = vmatpush.msra.mxu0 0.0
      %381 = vmatpush.msra.mxu0 0.0
      %382 = vmatpush.msra.mxu0 0.0
      %383 = vmatpush.msra.mxu0 0.0
      %384 = vmatpush.msra.mxu0 0.0
      %385 = vmatpush.msra.mxu0 0.0
      %386 = vmatpush.msra.mxu0 0.0
      %387 = vmatpush.msra.mxu0 0.0
      %388 = vmatpush.msra.mxu0 %v354
      %389 = vmatpush.msra.mxu0 %v340
      %390 = vmatpush.msra.mxu0 %v334
      %391 = vmatpush.msra.mxu0 %v325
      %392 = vmatmul.f32.gmra.mxu0 %v348
      %v393 = vpop.f32.mrf.mxu0
      %v394 = vadd.f32 %v344, %v393
      %395 = vdwg.mxu0
      %396 = vst [vmem:[%s170] sm:$0x3f] %v374
      %vm397 = vcmask 783360
      %398 = vst.msk [vmem:[%s170 + $0x8] sm:$0x3f] %vm397, %v394
      %p399 = scmp.lt.s32.totalorder %s14, 1
      %s400 = scalar_select %p399, %s14, 1
      %s401 = smul.addr %s400, 2
      %s402 = smul.addr %s401, 8
      %s403 = scalar_lea.vmem %s3, %s402
      // Predicated region
      $region33: #{tpu_custom_call.1} parent=31 // pred_check
        %p404 = pneg %p100
      $region34: #{tpu_custom_call.1} parent=31 // pred_check_branch
        %406 = sbr.rel (%p404) target = $region36
      $region35: #{tpu_custom_call.1} parent=31 // pred_region
        _
      $region36: #{tpu_custom_call.1} parent=31 // pred_fallthru
        _
    $region32: #{tpu_custom_call.1} parent=5 // pred_fallthru
      _
    %p407 = scmp.le.s32.totalorder 2, %s9
    // Predicated region
    $region37: #{tpu_custom_call.1} parent=5 // pred_check
      %p408 = pneg %p407
    $region38: #{tpu_custom_call.1} parent=5 // pred_check_branch
      %410 = sbr.rel (%p408) target = $region40
    $region39: #{tpu_custom_call.1} parent=5 // pred_region
      %s411 = ssub.s32 %s9, 2
      // Predicated region
      $region41: #{tpu_custom_call.1} parent=39 // pred_check
        %p412 = pneg %p106
      $region42: #{tpu_custom_call.1} parent=39 // pred_check_branch
        %414 = sbr.rel (%p412) target = $region44
      $region43: #{tpu_custom_call.1} parent=39 // pred_region
        %p415 = scmp.lt.s32.totalorder %s15, 1
        %s416 = scalar_select %p415, %s15, 1
        %s417 = smul.addr %s416, 2
        %s418 = smul.addr %s417, 8
        %s419 = scalar_lea.vmem %s3, %s418
      $region44: #{tpu_custom_call.1} parent=39 // pred_fallthru
        _
    $region40: #{tpu_custom_call.1} parent=5 // pred_fallthru
      _
  $region6: #{tpu_custom_call.1} parent=0 // loop_footer
    %s13 = sadd.s32 1, %s9
  $region7: #{tpu_custom_call.1} parent=0 // loop_footer_branch
    %8 = sbr.rel target = $region3
  $region8: #{tpu_custom_call.1} parent=0 // loop_exit
    _

</llo_original>
